<compile_context>
chip_gen: v7x
topology: tpu7x:2x2x1
jax: 0.10.0
libtpu: 0.0.40
codegen_flags: <defaults>
</compile_context>

<pallas_src>
import functools

import jax
import jax.numpy as jnp
from jax import lax
from jax.experimental import pallas as pl
from jax.experimental.pallas import tpu as pltpu

_LANES = 128        # vreg lane width
_BLOCK_ROWS = 2048  # rows per grid step: 2048x128 f32 = 1 MiB tile
_CHUNK_ROWS = 64    # rows per inner accumulation chunk (8 f32 vregs live)


@functools.lru_cache(maxsize=None)
def _tensorcores_per_chip() -> int:
    """2 on v7x (two TensorCores per chip), 1 on v5e/v6e; conservative default 1."""
    try:
        dev = jax.devices()[0]
        if dev.platform != "tpu":
            return 1
        kind = str(getattr(dev, "device_kind", "")).lower()
        if "v7" in kind or "tpu7" in kind:
            return 2
    except Exception:  # pragma: no cover - defensive
        pass
    return 1


def _tile_partial(x_refs, targets, rows_valid):
    """(8, LANES) f32 partial sums of the BCE terms over the first
    `rows_valid` (static) rows of the resident (BLOCK_ROWS, LANES) tile."""
    full_chunks = rows_valid // _CHUNK_ROWS
    rem_rows = rows_valid - full_chunks * _CHUNK_ROWS

    def chunk_sum(acc, r0, valid_rows=None):
        # One _CHUNK_ROWS x LANES chunk per input: EUP log + VPU clamp on a few
        # vregs at a time, folded straight into the (8,128) accumulator.
        for x_ref, target_one in zip(x_refs, targets):
            v = x_ref[pl.ds(r0, _CHUNK_ROWS), :].astype(jnp.float32)
            logv = jnp.log(v) if target_one else jnp.log(1.0 - v)
            t = -jnp.maximum(logv, -100.0)
            if valid_rows is not None:
                row = lax.broadcasted_iota(jnp.int32, (_CHUNK_ROWS, _LANES), 0)
                t = jnp.where(row < valid_rows, t, 0.0)
            acc = acc + t.reshape(_CHUNK_ROWS // 8, 8, _LANES).sum(axis=0)
        return acc

    acc = jnp.zeros((8, _LANES), jnp.float32)
    if full_chunks:
        acc = lax.fori_loop(
            0, full_chunks,
            lambda j, a: chunk_sum(
                a, pl.multiple_of(j * _CHUNK_ROWS, _CHUNK_ROWS)),
            acc, unroll=True)
    if rem_rows:
        # Only the single ragged chunk of the single boundary tile is masked;
        # rows past the data are OOB garbage zeroed by the select (select does
        # not propagate NaN from the unselected branch).
        acc = chunk_sum(acc, full_chunks * _CHUNK_ROWS, valid_rows=rem_rows)
    return acc


def _make_kernel(targets, rows, blocks_per_core):
    num_full = rows // _BLOCK_ROWS                 # fully-valid interior tiles
    tail_rows = rows - num_full * _BLOCK_ROWS      # rows in the boundary tile
    n_in = len(targets)

    def kernel(*refs):
        x_refs = refs[:n_in]
        out_ref = refs[n_in]
        acc_ref = refs[n_in + 1]
        c = pl.program_id(0)
        i = pl.program_id(1)
        g = c * blocks_per_core + i                # logical block index

        @pl.when(i == 0)
        def _init():
            acc_ref[...] = jnp.zeros_like(acc_ref)

        if num_full:
            @pl.when(g < num_full)                 # fast path: no masking
            def _interior():
                acc_ref[...] += _tile_partial(x_refs, targets, _BLOCK_ROWS)

        if tail_rows:
            @pl.when(g == num_full)                # single masked boundary tile
            def _boundary():
                acc_ref[...] += _tile_partial(x_refs, targets, tail_rows)

        # Padded per-core iterations (g >= num_blocks) do no compute at all.

        @pl.when(i == blocks_per_core - 1)
        def _finalize():
            # Single cross-lane reduce + scalar SMEM store, once per core.
            out_ref[0, 0] = jnp.sum(acc_ref[...])

    return kernel


def _launch(x2ds, targets):
    rows = x2ds[0].shape[0]
    num_blocks = pl.cdiv(rows, _BLOCK_ROWS)
    num_cores = max(1, min(_tensorcores_per_chip(), num_blocks))
    blocks_per_core = pl.cdiv(num_blocks, num_cores)
    last_block = num_blocks - 1

    def in_map(c, i):
        # Clamp so padded per-core steps never DMA out of range; the clamped
        # index equals the previous step's, so the copy is skipped and the
        # kernel skips the compute.
        return (jnp.minimum(c * blocks_per_core + i, last_block), 0)

    in_spec = pl.BlockSpec((_BLOCK_ROWS, _LANES), in_map)
    out_spec = pl.BlockSpec((1, 1), lambda c, i: (c, 0),
                            memory_space=pltpu.MemorySpace.SMEM)
    core_sem = pltpu.CORE_PARALLEL if num_cores > 1 else pltpu.ARBITRARY

    n_terms = rows * _LANES * len(targets)
    n_bytes = sum(int(x.size) * x.dtype.itemsize for x in x2ds)

    partials = pl.pallas_call(
        _make_kernel(targets, rows, blocks_per_core),
        out_shape=jax.ShapeDtypeStruct((num_cores, 1), jnp.float32),
        grid=(num_cores, blocks_per_core),
        in_specs=[in_spec] * len(x2ds),
        out_specs=out_spec,
        scratch_shapes=[pltpu.VMEM((8, _LANES), jnp.float32)],
        compiler_params=pltpu.CompilerParams(
            dimension_semantics=(core_sem, pltpu.ARBITRARY)),
        cost_estimate=pl.CostEstimate(
            flops=6 * n_terms, transcendentals=n_terms,
            bytes_accessed=n_bytes),
    )(*x2ds)
    return jnp.sum(partials)


def _plain_terms_sum(x, target_one):
    xf = x.astype(jnp.float32)
    logv = jnp.log(xf) if target_one else jnp.log(1.0 - xf)
    return jnp.sum(-jnp.maximum(logv, -100.0))


def _split_rows(x):
    """(rows, 128) main view (or None) plus an optional <128-element lane tail."""
    n = int(x.size)
    rows = n // _LANES
    rem = n - rows * _LANES
    flat = x.reshape(-1)                   # free for contiguous inputs
    if rem == 0:
        return flat.reshape(rows, _LANES), None
    if rows == 0:
        return None, flat
    # TODO(synk): for ragged sizes this prefix slice still materializes a copy
    # of the main part before the custom call; a zero-copy path would need a
    # 1-D kernel layout.  Hit only when numel % 128 != 0.
    main = lax.slice(flat, (0,), (rows * _LANES,)).reshape(rows, _LANES)
    tail = lax.slice(flat, (rows * _LANES,), (n,))
    return main, tail


def _bce_mean(x, target_one):
    n = int(x.size)
    main2d, tail = _split_rows(x)
    total = jnp.float32(0.0)
    if main2d is not None:
        total = total + _launch((main2d,), (target_one,))
    if tail is not None:
        total = total + _plain_terms_sum(tail, target_one)
    return total / jnp.float32(n)


def _bce_mean_fused(real, fake):
    n = int(real.size)
    r2d, r_tail = _split_rows(real)
    f2d, f_tail = _split_rows(fake)
    total = jnp.float32(0.0)
    if r2d is not None:
        total = total + _launch((r2d, f2d), (True, False))
    if r_tail is not None:
        total = total + _plain_terms_sum(r_tail, True)
        total = total + _plain_terms_sum(f_tail, False)
    # Same element count for both terms, so mean_real + mean_fake == total / n.
    return total / jnp.float32(n)


class BCELoss:
    """Pallas/JAX equivalent of the PyTorch BCELoss wrapper module.

    Inputs must lie in [0, 1] (post-sigmoid probabilities); out-of-range values
    silently yield NaN instead of PyTorch's runtime assertion.
    """

    def __call__(self, real: jax.Array, fake: jax.Array | None = None) -> jax.Array:
        if fake is not None and tuple(fake.shape) == tuple(real.shape):
            return _bce_mean_fused(real, fake)
        loss = _bce_mean(real, target_one=True)
        if fake is not None:
            loss = loss + _bce_mean(fake, target_one=False)
        return loss


if __name__ == "__main__":
    key = jax.random.PRNGKey(0)
    k_real, k_fake, k_odd = jax.random.split(key, 3)

    # Probabilities in (0, 1), as nn.BCELoss requires (post-sigmoid outputs).
    real = jax.random.uniform(k_real, (2, 4, 16, 16), dtype=jnp.float32,
                              minval=0.01, maxval=0.99)
    fake = jax.random.uniform(k_fake, (2, 4, 16, 16), dtype=jnp.float32,
                              minval=0.01, maxval=0.99)

    criterion = BCELoss()

    loss_real_only = criterion(real)
    loss_both = criterion(real, fake)
    jax.block_until_ready(loss_real_only)
    jax.block_until_ready(loss_both)

    # Pure-JAX reference checks.
    ref_real = jnp.mean(-jnp.maximum(jnp.log(real), -100.0))
    ref_both = ref_real + jnp.mean(-jnp.maximum(jnp.log(1.0 - fake), -100.0))
    assert jnp.allclose(loss_real_only, ref_real, rtol=1e-5, atol=1e-6), (
        loss_real_only, ref_real)
    assert jnp.allclose(loss_both, ref_both, rtol=1e-5, atol=1e-6), (
        loss_both, ref_both)

    # Ragged size: exercises the masked boundary tile + plain-JAX lane tail.
    odd = jax.random.uniform(k_odd, (3, 100), dtype=jnp.float32,
                             minval=0.01, maxval=0.99)
    loss_odd = criterion(odd, odd)
    jax.block_until_ready(loss_odd)
    ref_odd = (jnp.mean(-jnp.maximum(jnp.log(odd), -100.0))
               + jnp.mean(-jnp.maximum(jnp.log(1.0 - odd), -100.0)))
    assert jnp.allclose(loss_odd, ref_odd, rtol=1e-5, atol=1e-6), (
        loss_odd, ref_odd)

    print("KERNEL_OK")
</pallas_src>

<mosaic_0001>
module attributes {stable_mosaic.version = 11 : i64} {
  func.func @kernel(%arg0: i32, %arg1: i32, %arg2: memref<2048x128xf32, #tpu.memory_space<vmem>>, %arg3: memref<1x1xf32, #tpu.memory_space<smem>>, %arg4: memref<8x128xf32, #tpu.memory_space<vmem>>) attributes {dimension_semantics = [#tpu.dimension_semantics<arbitrary>, #tpu.dimension_semantics<arbitrary>], iteration_bounds = array<i64: 1, 1>, scalar_prefetch = 0 : i64, scratch_operands = 1 : i64, tpu.core_type = #tpu.core_type<tc>, window_params = [{transform_indices = @transform_0, window_bounds = array<i64: 2048, 128>}, {transform_indices = @transform_1, window_bounds = array<i64: 1, 1>}]} {
    %c1_i32 = arith.constant 1 : i32
    %0 = arith.muli %arg0, %c1_i32 : i32
    %1 = arith.addi %0, %arg1 : i32
    %c0_i32 = arith.constant 0 : i32
    %2 = arith.cmpi eq, %arg1, %c0_i32 : i32
    %3 = arith.extui %2 : i1 to i32
    %c0_i32_0 = arith.constant 0 : i32
    %4 = arith.cmpi ne, %3, %c0_i32_0 : i32
    scf.if %4 {
      %cst = arith.constant 0.000000e+00 : f32
      %11 = vector.broadcast %cst : f32 to vector<8x128xf32>
      %c0 = arith.constant 0 : index
      %c0_5 = arith.constant 0 : index
      %12 = vector.load %arg4[%c0, %c0_5] : memref<8x128xf32, #tpu.memory_space<vmem>>, vector<8x128xf32>
      tpu.vector_store %arg4[%c0, %c0_5], %11 {strides = array<i32>} : memref<8x128xf32, #tpu.memory_space<vmem>>, vector<8x128xf32>,
    } else {
    }
    %c0_i32_1 = arith.constant 0 : i32
    %5 = arith.cmpi eq, %1, %c0_i32_1 : i32
    %6 = arith.extui %5 : i1 to i32
    %c0_i32_2 = arith.constant 0 : i32
    %7 = arith.cmpi ne, %6, %c0_i32_2 : i32
    scf.if %7 {
      %c0 = arith.constant 0 : index
      %c0_5 = arith.constant 0 : index
      %11 = vector.load %arg4[%c0, %c0_5] : memref<8x128xf32, #tpu.memory_space<vmem>>, vector<8x128xf32>
      %cst = arith.constant 0.000000e+00 : f32
      %12 = vector.broadcast %cst : f32 to vector<8x128xf32>
      %c0_6 = arith.constant 0 : index
      %c0_7 = arith.constant 0 : index
      %13 = vector.load %arg2[%c0_6, %c0_7] : memref<2048x128xf32, #tpu.memory_space<vmem>>, vector<64x128xf32>
      %14 = math.log %13 : vector<64x128xf32>
      %cst_8 = arith.constant -1.000000e+02 : f32
      %15 = vector.broadcast %cst_8 : f32 to vector<64x128xf32>
      %16 = arith.maximumf %14, %15 : vector<64x128xf32>
      %cst_9 = arith.constant 0.000000e+00 : f32
      %17 = vector.broadcast %cst_9 : f32 to vector<64x128xf32>
      %18 = arith.subf %17, %16 : vector<64x128xf32>
      %19 = tpu.iota {dimensions = array<i32: 0>} : vector<64x128xi32>
      %c16_i32 = arith.constant 16 : i32
      %20 = vector.broadcast %c16_i32 : i32 to vector<64x128xi32>
      %21 = arith.cmpi slt, %19, %20 : vector<64x128xi32>
      %cst_10 = arith.constant 0.000000e+00 : f32
      %22 = vector.broadcast %cst_10 : f32 to vector<64x128xf32>
      %23 = arith.select %21, %18, %22 : vector<64x128xi1>, vector<64x128xf32>
      %24 = vector.shape_cast %23 : vector<64x128xf32> to vector<8x8x128xf32>
      %cst_11 = arith.constant dense<0.000000e+00> : vector<8x128xf32>
      %25 = vector.multi_reduction <add>, %24, %cst_11 [0] : vector<8x8x128xf32> to vector<8x128xf32>
      %26 = arith.addf %12, %25 : vector<8x128xf32>
      %27 = arith.addf %11, %26 : vector<8x128xf32>
      %c0_12 = arith.constant 0 : index
      %c0_13 = arith.constant 0 : index
      %28 = vector.load %arg4[%c0_12, %c0_13] : memref<8x128xf32, #tpu.memory_space<vmem>>, vector<8x128xf32>
      tpu.vector_store %arg4[%c0_12, %c0_13], %27 {strides = array<i32>} : memref<8x128xf32, #tpu.memory_space<vmem>>, vector<8x128xf32>,
    } else {
    }
    %c0_i32_3 = arith.constant 0 : i32
    %8 = arith.cmpi eq, %arg1, %c0_i32_3 : i32
    %9 = arith.extui %8 : i1 to i32
    %c0_i32_4 = arith.constant 0 : i32
    %10 = arith.cmpi ne, %9, %c0_i32_4 : i32
    scf.if %10 {
      %c0 = arith.constant 0 : index
      %c0_5 = arith.constant 0 : index
      %11 = vector.load %arg4[%c0, %c0_5] : memref<8x128xf32, #tpu.memory_space<vmem>>, vector<8x128xf32>
      %12 = vector.shape_cast %11 : vector<8x128xf32> to vector<1x8x128xf32>
      %cst = arith.constant dense<0.000000e+00> : vector<1xf32>
      %13 = vector.multi_reduction <add>, %12, %cst [1, 2] : vector<1x8x128xf32> to vector<1xf32>
      %14 = vector.shape_cast %13 : vector<1xf32> to vector<1x1x1xf32>
      %15 = vector.extract %14[0, 0, 0] : f32 from vector<1x1x1xf32>
      %c0_6 = arith.constant 0 : index
      %c0_7 = arith.constant 0 : index
      %16 = memref.load %arg3[%c0_6, %c0_7] : memref<1x1xf32, #tpu.memory_space<smem>>
      memref.store %15, %arg3[%c0_6, %c0_7] : memref<1x1xf32, #tpu.memory_space<smem>>
    } else {
    }
    return
  }
  func.func @transform_0(%arg0: i32, %arg1: i32) -> (i32, i32) {
    %c1_i32 = arith.constant 1 : i32
    %0 = arith.muli %arg0, %c1_i32 : i32
    %1 = arith.addi %0, %arg1 : i32
    %c0_i32 = arith.constant 0 : i32
    %2 = arith.minsi %1, %c0_i32 : i32
    %c0_i32_0 = arith.constant 0 : i32
    %c0_i32_1 = arith.constant 0 : i32
    return %2, %c0_i32_0 : i32, i32
  }
  func.func @transform_1(%arg0: i32, %arg1: i32) -> (i32, i32) {
    %c0_i32 = arith.constant 0 : i32
    %c0_i32_0 = arith.constant 0 : i32
    return %arg0, %c0_i32 : i32, i32
  }
}

</mosaic_0001>

<llo_original>
// kernel: tpu_custom_call.1
$region0: #{tpu_custom_call.1}
  #allocation0 [shape = 'u32[]', space=smem, size = 0x4, offset = 0x4, fixed_abs, tag = 'smem constant byte address 0x4 - core index']
  #allocation1 [shape = 'u32[144,128]{1,0:T(1,128)}', space=vmem, size = 0x12000, scoped, tag = 'internal scratch']
  #allocation2 [shape = 'f32[8,128]{1,0:T(8,128)}', space=vmem, size = 0x1000, scoped, tag = 'scratch operand']
  %s0 = inlined_call_operand.hbm [shape: f32[16,128], index: 0, kind: input, shape index: {}]
  %s1 = inlined_call_operand.hbm [shape: f32[1,1], index: 1, kind: output, shape index: {}]
  %s2 = sld [smem:[#allocation0]]
  $region30: #{tpu_custom_call.1} parent=0
    _
  %s4 = ssub.s32 1, %s2
  %s5 = scalar_select 0, %s4, %s2
  $region1: #{tpu_custom_call.1} parent=0
    #allocation3 [shape = 'u8[1048576]{0}', space=vmem, size = 0x100000, scoped, tag = 'input window, operand 0, single buffered']
    #allocation4 [shape = 's32[1]{0}', space=sflag, size = 0x4, scoped, tag = 'scoped memory for tpu_custom_call.1']
    #allocation5 [shape = 's32[1]{0}', space=sflag, size = 0x4, scoped, tag = 'scoped memory for tpu_custom_call.1']
    #allocation6 [shape = 'u8[512]{0}', space=smem, size = 0x200, scoped, tag = 'output window, operand 0, single buffered']
    %6 = vsyncpa [#allocation4], 0
    %7 = vsyncpa [#allocation5], 0
    // Predicated region
    $region2: #{tpu_custom_call.1} parent=1 // pred_check
      _
    $region3: #{tpu_custom_call.1} parent=1 // pred_check_branch
      %9 = sbr.rel (0) target = $region5
    $region4: #{tpu_custom_call.1} parent=1 // pred_region
      %s10 = sadd.s32 0, 0
      %p11 = scmp.lt.s32.totalorder %s10, 0
      %s12 = scalar_select %p11, %s10, 0
      %s13 = smul.u32 256, %s12
      %s14 = ssub.s32 2, %s13
      %s15 = smul.u32 128, %s14
      %s17 = ssub.s32 32768, %s15
      %18 = vsyncadd [#allocation4], %s17
      %p19 = scmp.ne.s32.totalorder 0, %s15
      %s20 = smul.addr %s13, 128
      %s21 = scalar_lea.hbm %s0, %s20
      %s22 = smul.u32 8, %s14
      %s23 = sshll.u32 [#allocation3], 4
      %s24 = int_to_ptr.vmem [resolvable:$true] %s23
      %s25 = sshll.u32 %s22, 4
      %29 = dma.hbm_to_vmem [thread:$0]  (%p19), %s21, %s25, %s24, [#allocation4], 128, 128, 8
    $region5: #{tpu_custom_call.1} parent=1 // pred_fallthru
      _
    // Predicated region
    $region6: #{tpu_custom_call.1} parent=1 // pred_check
      _
    $region7: #{tpu_custom_call.1} parent=1 // pred_check_branch
      %31 = sbr.rel (0) target = $region9
    $region8: #{tpu_custom_call.1} parent=1 // pred_region
      %32 = dma.done [#allocation4], 32768
    $region9: #{tpu_custom_call.1} parent=1 // pred_fallthru
      _
    %s33 = sadd.s32 0, 0
    %p34 = scmp.lt.s32.totalorder %s33, 0
    %s35 = scalar_select %p34, %s33, 0
    %s36 = smul.u32 256, %s35
    %s37 = ssub.s32 2, %s36
    %s38 = smul.u32 128, %s37
    %s39 = sadd.s32 0, 0
    %p40 = scmp.eq.s32.totalorder 0, 0
    // Predicated region
    $region10: #{tpu_custom_call.1} parent=1 // pred_check
      %p41 = pneg %p40
    $region11: #{tpu_custom_call.1} parent=1 // pred_check_branch
      %43 = sbr.rel (%p41) target = $region13
    $region12: #{tpu_custom_call.1} parent=1 // pred_region
      %44 = vst [vmem:[#allocation2] sm:$0xff] 0.0
    $region13: #{tpu_custom_call.1} parent=1 // pred_fallthru
      _
    %p45 = scmp.eq.s32.totalorder %s39, 0
    // Predicated region
    $region14: #{tpu_custom_call.1} parent=1 // pred_check
      %p46 = pneg %p45
    $region15: #{tpu_custom_call.1} parent=1 // pred_check_branch
      %48 = sbr.rel (%p46) target = $region17
    $region16: #{tpu_custom_call.1} parent=1 // pred_region
      %v49 = vld [vmem:[#allocation2] sm:$0xff]
      %v50 = vld [vmem:[#allocation3] sm:$0xff]
      %v51 = vld [vmem:[#allocation3 + $0x8] sm:$0xff]
      %v52 = vld [vmem:[#allocation3 + $0x10] sm:$0xff]
      %v53 = vld [vmem:[#allocation3 + $0x18] sm:$0xff]
      %v54 = vld [vmem:[#allocation3 + $0x20] sm:$0xff]
      %v55 = vld [vmem:[#allocation3 + $0x28] sm:$0xff]
      %v56 = vld [vmem:[#allocation3 + $0x30] sm:$0xff]
      %v57 = vld [vmem:[#allocation3 + $0x38] sm:$0xff]
      %v58 = vlog2.pop %v50
      %v59 = vmul.f32 %v58, 0.6931472
      %v60 = vlog2.pop %v51
      %v61 = vmul.f32 %v60, 0.6931472
      %v62 = vlog2.pop %v52
      %v63 = vmul.f32 %v62, 0.6931472
      %v64 = vlog2.pop %v53
      %v65 = vmul.f32 %v64, 0.6931472
      %v66 = vlog2.pop %v54
      %v67 = vmul.f32 %v66, 0.6931472
      %v68 = vlog2.pop %v55
      %v69 = vmul.f32 %v68, 0.6931472
      %v70 = vlog2.pop %v56
      %v71 = vmul.f32 %v70, 0.6931472
      %v72 = vlog2.pop %v57
      %v73 = vmul.f32 %v72, 0.6931472
      %v74 = vmax.f32 %v59, -100.0
      %v75 = vmax.f32 %v61, -100.0
      %v76 = vmax.f32 %v63, -100.0
      %v77 = vmax.f32 %v65, -100.0
      %v78 = vmax.f32 %v67, -100.0
      %v79 = vmax.f32 %v69, -100.0
      %v80 = vmax.f32 %v71, -100.0
      %v81 = vmax.f32 %v73, -100.0
      %v82 = vsub.f32 0.0, %v74
      %v83 = vsub.f32 0.0, %v75
      %v84 = vsub.f32 0.0, %v76
      %v85 = vsub.f32 0.0, %v77
      %v86 = vsub.f32 0.0, %v78
      %v87 = vsub.f32 0.0, %v79
      %v88 = vsub.f32 0.0, %v80
      %v89 = vsub.f32 0.0, %v81
      %v90 = vlaneseq
      %v91 = vshrl.u32 %v90, 7
      %v92 = vadd.s32 %v91, 8
      %v93 = vadd.s32 %v91, 16
      %v94 = vadd.s32 %v91, 24
      %v95 = vadd.s32 %v91, 32
      %v96 = vadd.s32 %v91, 40
      %v97 = vadd.s32 %v91, 48
      %v98 = vadd.s32 %v91, 56
      %vm99 = vcmp.lt.s32.totalorder %v91, 16
      %vm100 = vcmp.lt.s32.totalorder %v92, 16
      %vm101 = vcmp.lt.s32.totalorder %v93, 16
      %vm102 = vcmp.lt.s32.totalorder %v94, 16
      %vm103 = vcmp.lt.s32.totalorder %v95, 16
      %vm104 = vcmp.lt.s32.totalorder %v96, 16
      %vm105 = vcmp.lt.s32.totalorder %v97, 16
      %vm106 = vcmp.lt.s32.totalorder %v98, 16
      %v107 = vsel %vm99, %v82, 0.0
      %v108 = vsel %vm100, %v83, 0.0
      %v109 = vsel %vm101, %v84, 0.0
      %v110 = vsel %vm102, %v85, 0.0
      %v111 = vsel %vm103, %v86, 0.0
      %v112 = vsel %vm104, %v87, 0.0
      %v113 = vsel %vm105, %v88, 0.0
      %v114 = vsel %vm106, %v89, 0.0
      %v115 = vadd.f32 %v107, %v108
      %v116 = vadd.f32 %v115, %v109
      %v117 = vadd.f32 %v116, %v110
      %v118 = vadd.f32 %v117, %v111
      %v119 = vadd.f32 %v118, %v112
      %v120 = vadd.f32 %v119, %v113
      %v121 = vadd.f32 %v120, %v114
      %v122 = vadd.f32 %v121, 0.0
      %v123 = vadd.f32 %v49, %v122
      %124 = vst [vmem:[#allocation2] sm:$0xff] %v123
    $region17: #{tpu_custom_call.1} parent=1 // pred_fallthru
      _
    // Predicated region
    $region18: #{tpu_custom_call.1} parent=1 // pred_check
      %p125 = pneg %p40
    $region19: #{tpu_custom_call.1} parent=1 // pred_check_branch
      %127 = sbr.rel (%p125) target = $region21
    $region20: #{tpu_custom_call.1} parent=1 // pred_region
      %v128 = vld [vmem:[#allocation2] sm:$0xff]
      %129 = vadd.xlane.f32.xlu0 %v128
      %v130 = vpop.xlane.xlu0 %129
      %v131 = vrot.slane %v130, 4
      %v132 = vadd.f32 %v130, %v131
      %v133 = vrot.slane %v132, 2
      %v134 = vadd.f32 %v132, %v133
      %v135 = vrot.slane %v134, 1
      %v136 = vadd.f32 %v134, %v135
      %s137 = vtos %v136
      %s138 = scalar_lea.smem [#allocation6], 0
      %139 = sst [smem:[%s138]] %s137
    $region21: #{tpu_custom_call.1} parent=1 // pred_fallthru
      _
    // Predicated region
    $region22: #{tpu_custom_call.1} parent=1 // pred_check
      _
    $region23: #{tpu_custom_call.1} parent=1 // pred_check_branch
      %141 = sbr.rel (0) target = $region25
    $region24: #{tpu_custom_call.1} parent=1 // pred_region
      %s143 = ssub.s32 16, 16
      %144 = vsyncadd [#allocation5], %s143
      %147 = dma.smem_to_hbm [#allocation6], 16, %s1, [#allocation5]
    $region25: #{tpu_custom_call.1} parent=1 // pred_fallthru
      _
    // Predicated region
    $region26: #{tpu_custom_call.1} parent=1 // pred_check
      _
    $region27: #{tpu_custom_call.1} parent=1 // pred_check_branch
      %149 = sbr.rel (0) target = $region29
    $region28: #{tpu_custom_call.1} parent=1 // pred_region
      %150 = dma.done [#allocation5], 16
    $region29: #{tpu_custom_call.1} parent=1 // pred_fallthru
      _
    %151 = sfence
    %152 = vsyncpa [#allocation4], 1
    %153 = vsyncpa [#allocation5], 1

</llo_original>
